<compile_context>
chip_gen: v7x
topology: tpu7x:2x2x1
jax: 0.10.0
libtpu: 0.0.40
codegen_flags: <defaults>
</compile_context>

<pallas_src>
import functools
import math

import jax
import jax.numpy as jnp
import numpy as np
from jax.experimental import pallas as pl
from jax.experimental.pallas import tpu as pltpu


def _round_up(v, m):
    return (v + m - 1) // m * m


@functools.lru_cache(maxsize=None)
def _vmem_budget_bytes():
    """Best-effort per-core VMEM budget (3/4 of capacity, capped at 100 MiB).

    v5e/v6e have 128 MiB VMEM per TensorCore, v7x has 64 MiB; fall back to the
    conservative v7x figure if the query is unavailable.
    """
    cap = 64 * 1024 * 1024
    try:
        info = pltpu.get_tpu_info()
        cap = int(getattr(info, "vmem_capacity_bytes", cap)) or cap
    except Exception:
        pass
    return int(min(cap * 3 // 4, 100 * 1024 * 1024))


@functools.lru_cache(maxsize=None)
def _num_tensorcores():
    """2 on v7x-class chips (2 TensorCores/chip), 1 on v5e/v6e."""
    try:
        kind = jax.devices()[0].device_kind.lower()
    except Exception:
        return 1
    return 2 if "7" in kind else 1


# ----------------------------------------------------------------------------
# Fused BrainGCN kernel (the whole GCN branch of EEGTransformerCNN)
# ----------------------------------------------------------------------------
def _brain_gcn_kernel(x_ref, adjt_ref, acol_ref, w1_ref, w2_ref, o_ref, *, inv_l):
    # x_ref:    (Bt, Cp, L)   raw EEG batch tile, channels zero-padded to Cp
    # adjt_ref: (Cp, Cp)      adj^T (resident, constant index_map)
    # acol_ref: (1, Cp)       column sums of adj scaled by 1/C (resident)
    # w1_ref:   (1, H)        gc1 weight (F_in == 1)
    # w2_ref:   (H, Op)       gc2 weight, out dim lane-padded to Op
    # o_ref:    (Bt, Op)      per-sample GCN embedding (node-mean of gc2 out)
    node = jnp.sum(x_ref[...], axis=2) * inv_l                    # (Bt, Cp) f32

    # gc1 aggregation: (adj @ node^T)^T == node @ adj^T  -> one 2-D matmul.
    anb = jnp.dot(node, adjt_ref[...],
                  preferred_element_type=jnp.float32)             # (Bt, Cp)

    # gc1 support is rank-1 (F_in == 1): relu(anb[b,c] * w1[h]) on the VPU.
    h1 = jnp.maximum(anb[:, :, None] * w1_ref[...][None], 0.0)    # (Bt, Cp, H)

    # gc2 aggregation + node mean collapse to a colsum-weighted reduction:
    #   mean_c (adj @ (h1 @ w2))[b,c,:] == (sum_c acol[c]*h1[b,c,:]) @ w2
    g = jnp.sum(acol_ref[...][:, :, None] * h1, axis=1)           # (Bt, H)

    out = jnp.dot(g, w2_ref[...], preferred_element_type=jnp.float32)  # (Bt, Op)
    o_ref[...] = out.astype(o_ref.dtype)


def make_brain_gcn(adj, w1, w2, *, block_b=None):
    """Build a fused BrainGCN forward: x (B, C, L) -> (B, gcn_out_dim).

    Matches BrainGCN.forward exactly:
      h = relu(gc1(mean_t(x)[..., None], adj)); h = gc2(h, adj); h.mean(nodes).
    Constants are padded / preprocessed once here, outside the per-step path.
    """
    C = adj.shape[0]
    H = w1.shape[1]
    O = w2.shape[1]
    assert adj.shape == (C, C) and w1.shape == (1, H) and w2.shape == (H, O)

    Cp = _round_up(C, 8)           # sublane-aligned node count
    Op = _round_up(O, 128)         # lane-dense output features

    adj_f = jnp.asarray(adj, jnp.float32)
    adjt_p = jnp.pad(adj_f.T, ((0, Cp - C), (0, Cp - C)))
    acol_p = jnp.pad(jnp.sum(adj_f, axis=0)[None, :] * (1.0 / C),
                     ((0, 0), (0, Cp - C)))                       # (1, Cp)
    w1_p = jnp.asarray(w1, jnp.float32)                           # (1, H)
    w2_p = jnp.pad(jnp.asarray(w2, jnp.float32), ((0, 0), (0, Op - O)))

    vmem_budget = _vmem_budget_bytes()
    n_tc = _num_tensorcores()

    def forward(x):
        B, c_in, L = x.shape
        assert c_in == C, f"expected {C} channels, got {c_in}"

        # ---- batch tile: double-buffered x/out tiles + f32 intermediates ---
        per_b = 4 * (2 * (Cp * L + Op) + Cp * (2 * H + 2))
        resident = 2 * 4 * (Cp * Cp + Cp + H + H * Op)
        bb = block_b
        if bb is None:
            avail = max(vmem_budget - resident, per_b)
            bb = max(1, min(B, avail // per_b))
            if n_tc >= 2 and B >= 16:
                bb = min(bb, -(-B // n_tc))    # shard batch across both TCs
        bb = int(bb)
        if bb >= B:
            bb = B                              # single grid step
        else:
            bb = max(8, (bb // 8) * 8)          # multi-step tiles: 8-aligned
            if bb >= B:
                bb = B
        Bp = _round_up(B, bb)
        grid = (Bp // bb,)

        xp = jnp.pad(x.astype(jnp.float32),
                     ((0, Bp - B), (0, Cp - C), (0, 0)))

        cost = pl.CostEstimate(
            flops=B * (C * L + 2 * C * C + 4 * C * H + 2 * H * O),
            transcendentals=0,
            bytes_accessed=4 * (Bp * Cp * L + Cp * Cp + Cp + H + H * Op
                                + Bp * Op),
        )

        out = pl.pallas_call(
            functools.partial(_brain_gcn_kernel, inv_l=1.0 / L),
            out_shape=jax.ShapeDtypeStruct((Bp, Op), jnp.float32),
            grid_spec=pltpu.PrefetchScalarGridSpec(
                num_scalar_prefetch=0,
                grid=grid,
                in_specs=[
                    pl.BlockSpec((bb, Cp, L), lambda b: (b, 0, 0)),
                    # Resident constants (constant index_map -> fetched once).
                    # TODO(synk): pipeline_mode=pl.Buffered(1) would drop their
                    # second VMEM buffer; skipped here since they are KB-scale.
                    pl.BlockSpec((Cp, Cp), lambda b: (0, 0)),
                    pl.BlockSpec((1, Cp), lambda b: (0, 0)),
                    pl.BlockSpec((1, H), lambda b: (0, 0)),
                    pl.BlockSpec((H, Op), lambda b: (0, 0)),
                ],
                out_specs=pl.BlockSpec((bb, Op), lambda b: (b, 0)),
            ),
            compiler_params=pltpu.CompilerParams(
                dimension_semantics=("parallel",),
                vmem_limit_bytes=vmem_budget,
            ),
            cost_estimate=cost,
        )(xp, adjt_p, acol_p, w1_p, w2_p)
        return out[:B, :O]

    return forward


# ----------------------------------------------------------------------------
# Standalone GraphConvolution (shared adjacency), mirrors GraphConvolution.forward
# ----------------------------------------------------------------------------
def _gcn_layer_kernel(x_ref, adj_ref, w_ref, o_ref, *, apply_relu):
    # Batch dim is squeezed by the BlockSpec (one sample per grid step):
    # x_ref: (Np, Fi)   adj_ref: (Np, Np)   w_ref: (Fi, Fop)   o_ref: (Np, Fop)
    fi = x_ref.shape[1]
    if fi == 1:
        # F_in == 1: rank-1 support -> VPU broadcast multiply, no MXU pass.
        support = x_ref[...] * w_ref[...]                      # (Np,1)*(1,Fop)
    else:
        support = jnp.dot(x_ref[...], w_ref[...],
                          preferred_element_type=jnp.float32)  # (Np, Fop)
    out = jnp.dot(adj_ref[...], support,
                  preferred_element_type=jnp.float32)          # (Np, Fop)
    if apply_relu:
        out = jnp.maximum(out, 0.0)
    o_ref[...] = out.astype(o_ref.dtype)


def graph_convolution(x, adj, weight, *, apply_relu=False):
    """output = adj @ (x @ weight) with a shared (N, N) adjacency.

    x: (B, N, F_in) -> (B, N, F_out).  One grid step per sample (mirroring the
    per-sample loop in BrainGCN.forward); adj and weight stay resident in VMEM.
    """
    B, N, F_in = x.shape
    F_out = weight.shape[1]
    assert adj.shape == (N, N) and weight.shape[0] == F_in
    # TODO(synk): per-sample (B, N, N) adjacency and node-row tiling for very
    # large N are not needed by the 12-node EEG montage and are left out.

    Np = _round_up(N, 8)
    Fop = _round_up(F_out, 128)

    xp = jnp.pad(x.astype(jnp.float32), ((0, 0), (0, Np - N), (0, 0)))
    adj_p = jnp.pad(jnp.asarray(adj, jnp.float32), ((0, Np - N), (0, Np - N)))
    w_p = jnp.pad(jnp.asarray(weight, jnp.float32), ((0, 0), (0, Fop - F_out)))

    cost = pl.CostEstimate(
        flops=2 * B * N * F_in * F_out + 2 * B * N * N * F_out,
        transcendentals=0,
        bytes_accessed=4 * (B * Np * F_in + Np * Np + F_in * Fop
                            + B * Np * Fop),
    )

    out = pl.pallas_call(
        functools.partial(_gcn_layer_kernel, apply_relu=apply_relu),
        out_shape=jax.ShapeDtypeStruct((B, Np, Fop), jnp.float32),
        grid_spec=pltpu.PrefetchScalarGridSpec(
            num_scalar_prefetch=0,
            grid=(B,),
            in_specs=[
                pl.BlockSpec((None, Np, F_in), lambda b: (b, 0, 0)),
                pl.BlockSpec((Np, Np), lambda b: (0, 0)),
                pl.BlockSpec((F_in, Fop), lambda b: (0, 0)),
            ],
            out_specs=pl.BlockSpec((None, Np, Fop), lambda b: (b, 0, 0)),
        ),
        compiler_params=pltpu.CompilerParams(
            dimension_semantics=("parallel",),
            vmem_limit_bytes=_vmem_budget_bytes(),
        ),
        cost_estimate=cost,
    )(xp, adj_p, w_p)
    return out[:, :N, :F_out]


# ----------------------------------------------------------------------------
# Module constants: bipolar EEG montage adjacency (matches the PyTorch spec)
# ----------------------------------------------------------------------------
BIPOLAR_CHANNELS = ['Fp2-T4', 'T4-O2', 'Fp2-C4', 'C4-O2', 'T4-C4', 'C4-Cz',
                    'Cz-C3', 'C3-T3', 'Fp1-T3', 'T3-O1', 'Fp1-C3', 'C3-O1']
EDGES = [('Fp2-T4', 'T4-O2'), ('Fp2-T4', 'Fp2-C4'), ('T4-O2', 'C4-O2'),
         ('Fp2-C4', 'C4-O2'), ('T4-C4', 'T4-O2'), ('T4-C4', 'C4-Cz'),
         ('C4-Cz', 'Cz-C3'), ('Cz-C3', 'C3-T3'), ('C3-T3', 'T3-O1'),
         ('Fp1-T3', 'T3-O1'), ('Fp1-T3', 'Fp1-C3'), ('Fp1-C3', 'C3-O1'),
         ('C3-O1', 'T3-O1')]


def build_normalized_adjacency():
    idx = {c: i for i, c in enumerate(BIPOLAR_CHANNELS)}
    n = len(BIPOLAR_CHANNELS)
    a = np.zeros((n, n), np.float32)
    for s, d in EDGES:
        a[idx[s], idx[d]] = 1.0
        a[idx[d], idx[s]] = 1.0
    dmat = np.diag(a.sum(axis=1))
    # torch adds 1e-5 elementwise to the whole matrix before sqrt/inv; replicate.
    d_inv_sqrt = np.linalg.inv(np.sqrt(dmat + 1e-5))
    return jnp.asarray(d_inv_sqrt @ a @ d_inv_sqrt, dtype=jnp.float32)


def _xavier_uniform(key, fan_in, fan_out, dtype=jnp.float32):
    bound = math.sqrt(6.0 / (fan_in + fan_out))
    return jax.random.uniform(key, (fan_in, fan_out), dtype=dtype,
                              minval=-bound, maxval=bound)


def brain_gcn_ref(x, adj, w1, w2):
    node = jnp.mean(x, axis=2)[..., None]                           # (B, C, 1)
    h = jax.nn.relu(jnp.einsum("nm,bmh->bnh", adj, node @ w1))
    h = jnp.einsum("nm,bmo->bno", adj, h @ w2)
    return jnp.mean(h, axis=1)


# ----------------------------------------------------------------------------
if __name__ == "__main__":
    key = jax.random.PRNGKey(0)
    kx, k1, k2, k3, k4, k5 = jax.random.split(key, 6)

    # --- Fused BrainGCN branch at the module's real shapes -------------------
    adj_norm = build_normalized_adjacency()            # (12, 12)
    B, C, L = 2, len(BIPOLAR_CHANNELS), 64
    H, O = 64, 128                                     # gcn_hidden_dim, gcn_out_dim

    x = jax.random.normal(kx, (B, C, L), dtype=jnp.float32)
    w1 = _xavier_uniform(k1, 1, H)
    w2 = _xavier_uniform(k2, H, O)

    gcn_forward = jax.jit(make_brain_gcn(adj_norm, w1, w2))
    out = jax.block_until_ready(gcn_forward(x))
    ref = brain_gcn_ref(x, adj_norm, w1, w2)
    assert out.shape == (B, O)
    assert jnp.allclose(out, ref, atol=1e-3, rtol=1e-3), "fused BrainGCN mismatch"

    # --- Standalone GraphConvolution layer (shared adjacency) ----------------
    Fi, Fo = 8, 32
    xg = jax.random.normal(k3, (B, C, Fi), dtype=jnp.float32)
    wg = _xavier_uniform(k4, Fi, Fo)
    outg = jax.block_until_ready(graph_convolution(xg, adj_norm, wg))
    refg = jnp.einsum("nm,bmf->bnf", adj_norm, xg @ wg)
    assert outg.shape == (B, C, Fo)
    assert jnp.allclose(outg, refg, atol=1e-3, rtol=1e-3), "GraphConvolution mismatch"

    # F_in == 1 (VPU broadcast) + fused ReLU path of the standalone layer.
    x1 = jax.random.normal(k5, (B, C, 1), dtype=jnp.float32)
    out1 = jax.block_until_ready(
        graph_convolution(x1, adj_norm, w1, apply_relu=True))
    ref1 = jax.nn.relu(jnp.einsum("nm,bmf->bnf", adj_norm, x1 @ w1))
    assert jnp.allclose(out1, ref1, atol=1e-3, rtol=1e-3), "GCN F_in==1 mismatch"

    print("KERNEL_OK")
</pallas_src>

<mosaic_0001>
module attributes {stable_mosaic.version = 11 : i64} {
  func.func @_brain_gcn_kernel(%arg0: i32, %arg1: memref<2x16x64xf32, #tpu.memory_space<vmem>>, %arg2: memref<16x16xf32, #tpu.memory_space<vmem>>, %arg3: memref<1x16xf32, #tpu.memory_space<vmem>>, %arg4: memref<1x64xf32, #tpu.memory_space<vmem>>, %arg5: memref<64x128xf32, #tpu.memory_space<vmem>>, %arg6: memref<2x128xf32, #tpu.memory_space<vmem>>) attributes {dimension_semantics = [#tpu.dimension_semantics<parallel>], iteration_bounds = array<i64: 1>, scalar_prefetch = 0 : i64, scratch_operands = 0 : i64, tpu.core_type = #tpu.core_type<tc>, window_params = [{transform_indices = @transform_0, window_bounds = array<i64: 2, 16, 64>}, {pipeline_mode = #tpu.pipeline_mode<synchronous>, transform_indices = @transform_1, window_bounds = array<i64: 16, 16>}, {pipeline_mode = #tpu.pipeline_mode<synchronous>, transform_indices = @transform_2, window_bounds = array<i64: 1, 16>}, {pipeline_mode = #tpu.pipeline_mode<synchronous>, transform_indices = @transform_3, window_bounds = array<i64: 1, 64>}, {pipeline_mode = #tpu.pipeline_mode<synchronous>, transform_indices = @transform_4, window_bounds = array<i64: 64, 128>}, {transform_indices = @transform_5, window_bounds = array<i64: 2, 128>}]} {
    %c0 = arith.constant 0 : index
    %c0_0 = arith.constant 0 : index
    %c0_1 = arith.constant 0 : index
    %0 = vector.load %arg1[%c0, %c0_0, %c0_1] : memref<2x16x64xf32, #tpu.memory_space<vmem>>, vector<2x16x64xf32>
    %cst = arith.constant dense<0.000000e+00> : vector<2x16xf32>
    %1 = vector.multi_reduction <add>, %0, %cst [2] : vector<2x16x64xf32> to vector<2x16xf32>
    %cst_2 = arith.constant 1.562500e-02 : f32
    %2 = vector.broadcast %cst_2 : f32 to vector<2x16xf32>
    %3 = arith.mulf %1, %2 : vector<2x16xf32>
    %c0_3 = arith.constant 0 : index
    %c0_4 = arith.constant 0 : index
    %4 = vector.load %arg2[%c0_3, %c0_4] : memref<16x16xf32, #tpu.memory_space<vmem>>, vector<16x16xf32>
    %cst_5 = arith.constant dense<0.000000e+00> : vector<2x16xf32>
    %5 = tpu.matmul %3, %4, %cst_5 {dimension_numbers = #tpu.dot_dimension_numbers<[1], [0], [0], [1], [0, 0, 1, 1], [], []>} : vector<2x16xf32>, vector<16x16xf32>, vector<2x16xf32> -> vector<2x16xf32>
    %6 = vector.shape_cast %5 : vector<2x16xf32> to vector<2x16x1xf32>
    %c0_6 = arith.constant 0 : index
    %c0_7 = arith.constant 0 : index
    %7 = vector.load %arg4[%c0_6, %c0_7] : memref<1x64xf32, #tpu.memory_space<vmem>>, vector<1x64xf32>
    %8 = vector.shape_cast %7 : vector<1x64xf32> to vector<1x1x64xf32>
    %9 = vector.broadcast %6 : vector<2x16x1xf32> to vector<2x16x64xf32>
    %10 = vector.broadcast %8 : vector<1x1x64xf32> to vector<2x16x64xf32>
    %11 = arith.mulf %9, %10 : vector<2x16x64xf32>
    %cst_8 = arith.constant 0.000000e+00 : f32
    %12 = vector.broadcast %cst_8 : f32 to vector<2x16x64xf32>
    %13 = arith.maximumf %11, %12 : vector<2x16x64xf32>
    %c0_9 = arith.constant 0 : index
    %c0_10 = arith.constant 0 : index
    %14 = vector.load %arg3[%c0_9, %c0_10] : memref<1x16xf32, #tpu.memory_space<vmem>>, vector<1x16xf32>
    %15 = vector.shape_cast %14 : vector<1x16xf32> to vector<1x16x1xf32>
    %16 = vector.broadcast %15 : vector<1x16x1xf32> to vector<2x16x64xf32>
    %17 = arith.mulf %16, %13 : vector<2x16x64xf32>
    %cst_11 = arith.constant dense<0.000000e+00> : vector<2x64xf32>
    %18 = vector.multi_reduction <add>, %17, %cst_11 [1] : vector<2x16x64xf32> to vector<2x64xf32>
    %c0_12 = arith.constant 0 : index
    %c0_13 = arith.constant 0 : index
    %19 = vector.load %arg5[%c0_12, %c0_13] : memref<64x128xf32, #tpu.memory_space<vmem>>, vector<64x128xf32>
    %cst_14 = arith.constant dense<0.000000e+00> : vector<2x128xf32>
    %20 = tpu.matmul %18, %19, %cst_14 {dimension_numbers = #tpu.dot_dimension_numbers<[1], [0], [0], [1], [0, 0, 1, 1], [], []>} : vector<2x64xf32>, vector<64x128xf32>, vector<2x128xf32> -> vector<2x128xf32>
    %c0_15 = arith.constant 0 : index
    %c0_16 = arith.constant 0 : index
    %21 = vector.load %arg6[%c0_15, %c0_16] : memref<2x128xf32, #tpu.memory_space<vmem>>, vector<2x128xf32>
    tpu.vector_store %arg6[%c0_15, %c0_16], %20 {strides = array<i32>} : memref<2x128xf32, #tpu.memory_space<vmem>>, vector<2x128xf32>,
    return
  }
  func.func @transform_0(%arg0: i32) -> (i32, i32, i32) {
    %c0_i32 = arith.constant 0 : i32
    %c0_i32_0 = arith.constant 0 : i32
    %c0_i32_1 = arith.constant 0 : i32
    return %arg0, %c0_i32, %c0_i32_0 : i32, i32, i32
  }
  func.func @transform_1(%arg0: i32) -> (i32, i32) {
    %c0_i32 = arith.constant 0 : i32
    %c0_i32_0 = arith.constant 0 : i32
    %c0_i32_1 = arith.constant 0 : i32
    return %c0_i32, %c0_i32_0 : i32, i32
  }
  func.func @transform_2(%arg0: i32) -> (i32, i32) {
    %c0_i32 = arith.constant 0 : i32
    %c0_i32_0 = arith.constant 0 : i32
    %c0_i32_1 = arith.constant 0 : i32
    return %c0_i32, %c0_i32_0 : i32, i32
  }
  func.func @transform_3(%arg0: i32) -> (i32, i32) {
    %c0_i32 = arith.constant 0 : i32
    %c0_i32_0 = arith.constant 0 : i32
    %c0_i32_1 = arith.constant 0 : i32
    return %c0_i32, %c0_i32_0 : i32, i32
  }
  func.func @transform_4(%arg0: i32) -> (i32, i32) {
    %c0_i32 = arith.constant 0 : i32
    %c0_i32_0 = arith.constant 0 : i32
    %c0_i32_1 = arith.constant 0 : i32
    return %c0_i32, %c0_i32_0 : i32, i32
  }
  func.func @transform_5(%arg0: i32) -> (i32, i32) {
    %c0_i32 = arith.constant 0 : i32
    %c0_i32_0 = arith.constant 0 : i32
    return %arg0, %c0_i32 : i32, i32
  }
}

</mosaic_0001>

<llo_original>
// kernel: forward.1
$region0: #{forward.1}
  #allocation0 [shape = 'u32[]', space=smem, size = 0x4, offset = 0x4, fixed_abs, tag = 'smem constant byte address 0x4 - core index']
  #allocation1 [shape = 'u32[144,128]{1,0:T(1,128)}', space=vmem, size = 0x12000, scoped, tag = 'internal scratch']
  %s0 = inlined_call_operand.vmem [shape: f32[2,16,64], index: 0, kind: input, shape index: {}]
  %s1 = inlined_call_operand.vmem [shape: f32[16,16], index: 1, kind: input, shape index: {}]
  %s2 = inlined_call_operand.vmem [shape: f32[1,16], index: 2, kind: input, shape index: {}]
  %s3 = inlined_call_operand.vmem [shape: f32[1,64], index: 3, kind: input, shape index: {}]
  %s4 = inlined_call_operand.vmem [shape: f32[64,128], index: 4, kind: input, shape index: {}]
  %s5 = inlined_call_operand.hbm [shape: f32[2,128], index: 5, kind: output, shape index: {}]
  %s6 = sld [smem:[#allocation0]]
  $region30: #{forward.1} parent=0
    _
  %s8 = ssub.s32 1, %s6
  %s9 = scalar_select 0, %s8, %s6
  $region1: #{forward.1} parent=0
    #allocation2 [shape = 'u8[1024]{0}', space=vmem, size = 0x400, scoped, tag = 'output window, operand 0, single buffered']
    #allocation3 [shape = 's32[1]{0}', space=sflag, size = 0x4, scoped, tag = 'scoped memory for forward.1']
    %10 = vsyncpa [#allocation3], 0
    // Predicated region
    $region2: #{forward.1} parent=1 // pred_check
      _
    $region3: #{forward.1} parent=1 // pred_check_branch
      %12 = sbr.rel (0) target = $region5
    $region4: #{forward.1} parent=1 // pred_region
      _
    $region5: #{forward.1} parent=1 // pred_fallthru
      _
    // Predicated region
    $region6: #{forward.1} parent=1 // pred_check
      _
    $region7: #{forward.1} parent=1 // pred_check_branch
      %14 = sbr.rel (0) target = $region9
    $region8: #{forward.1} parent=1 // pred_region
      _
    $region9: #{forward.1} parent=1 // pred_fallthru
      _
    // Predicated region
    $region10: #{forward.1} parent=1 // pred_check
      _
    $region11: #{forward.1} parent=1 // pred_check_branch
      %16 = sbr.rel (0) target = $region13
    $region12: #{forward.1} parent=1 // pred_region
      _
    $region13: #{forward.1} parent=1 // pred_fallthru
      _
    // Predicated region
    $region14: #{forward.1} parent=1 // pred_check
      _
    $region15: #{forward.1} parent=1 // pred_check_branch
      %18 = sbr.rel (0) target = $region17
    $region16: #{forward.1} parent=1 // pred_region
      _
    $region17: #{forward.1} parent=1 // pred_fallthru
      _
    // Predicated region
    $region18: #{forward.1} parent=1 // pred_check
      _
    $region19: #{forward.1} parent=1 // pred_check_branch
      %20 = sbr.rel (0) target = $region21
    $region20: #{forward.1} parent=1 // pred_region
      _
    $region21: #{forward.1} parent=1 // pred_fallthru
      _
    %v21 = vld [vmem:[%s0] sm:$0xff]
    %v22 = vld [vmem:[%s0 + $0x8] sm:$0xff]
    %v23 = vld [vmem:[%s0 + $0x10] sm:$0xff]
    %v24 = vld [vmem:[%s0 + $0x18] sm:$0xff]
    %vm25 = vcmask 523264
    %v26 = vsel %vm25, %v21, 0.0
    %27 = vadd.xlane.f32.xlu0 %v26
    %v28 = vpop.xlane.xlu0 %27
    %v29 = vsel %vm25, %v22, 0.0
    %30 = vadd.xlane.f32.xlu0 %v29
    %v31 = vpop.xlane.xlu0 %30
    %v32 = vsel %vm25, %v23, 0.0
    %33 = vadd.xlane.f32.xlu0 %v32
    %v34 = vpop.xlane.xlu0 %33
    %v35 = vsel %vm25, %v24, 0.0
    %36 = vadd.xlane.f32.xlu0 %v35
    %v37 = vpop.xlane.xlu0 %36
    %v38 = vmul.f32 %v28, 0.015625
    %v39 = vmul.f32 %v31, 0.015625
    %v40 = vmul.f32 %v34, 0.015625
    %v41 = vmul.f32 %v37, 0.015625
    %v42 = vld [vmem:[%s1] sm:$0xff]
    %v43 = vld [vmem:[%s1 + $0x8] sm:$0xff]
    %v48 = vlaneseq
    %v49 = vand.u32 %v48, 127
    %v50 = vlaneseq
    %v51 = vshrl.u32 %v50, 7
    %v52 = vsub.s32 %v49, %v51
    %v53 = vrot.slane %v38, %v52
    %v54 = vadd.s32 %v49, 4294967288
    %v55 = vlaneseq
    %v56 = vshrl.u32 %v55, 7
    %v57 = vsub.s32 %v54, %v56
    %v58 = vrot.slane %v39, %v57
    %vm59 = vcmask 130112
    %v60 = vsel %vm59, %v58, %v53
    %v61 = vlaneseq
    %v62 = vshrl.u32 %v61, 7
    %v63 = vsub.s32 %v49, %v62
    %v64 = vrot.slane %v40, %v63
    %v65 = vlaneseq
    %v66 = vshrl.u32 %v65, 7
    %v67 = vsub.s32 %v54, %v66
    %v68 = vrot.slane %v41, %v67
    %v69 = vsel %vm59, %v68, %v64
    %vm70 = vcmask 1041409
    %v71 = vsel %vm70, %v69, %v60
    %vm72 = vcmask 130048
    %v73 = vsel %vm72, %v71, 0
    %75 = vmatprep.subr.mxu0 0.0
    %76 = vmatpush1.msra.mxu0 %v42
    %77 = vmatprep.subr.mxu0 0.0
    %78 = vmatpush1.msra.mxu0 %v43
    %79 = vmatprep.subr.mxu0 0.0
    %80 = vmatpush1.msra.mxu0 0.0
    %81 = vmatprep.subr.mxu0 0.0
    %82 = vmatpush1.msra.mxu0 0.0
    %83 = vmatprep.subr.mxu0 0.0
    %84 = vmatpush1.msra.mxu0 0.0
    %85 = vmatprep.subr.mxu0 0.0
    %86 = vmatpush1.msra.mxu0 0.0
    %87 = vmatprep.subr.mxu0 0.0
    %88 = vmatpush1.msra.mxu0 0.0
    %89 = vmatprep.subr.mxu0 0.0
    %90 = vmatpush1.msra.mxu0 0.0
    %91 = vmatprep.subr.mxu0 0.0
    %92 = vmatpush1.msra.mxu0 0.0
    %93 = vmatprep.subr.mxu0 0.0
    %94 = vmatpush1.msra.mxu0 0.0
    %95 = vmatprep.subr.mxu0 0.0
    %96 = vmatpush1.msra.mxu0 0.0
    %97 = vmatprep.subr.mxu0 0.0
    %98 = vmatpush1.msra.mxu0 0.0
    %99 = vmatprep.subr.mxu0 0.0
    %100 = vmatpush1.msra.mxu0 0.0
    %101 = vmatprep.subr.mxu0 0.0
    %102 = vmatpush1.msra.mxu0 0.0
    %103 = vmatprep.subr.mxu0 0.0
    %104 = vmatpush1.msra.mxu0 0.0
    %105 = vmatprep.subr.mxu0 0.0
    %106 = vmatpush1.msra.mxu0 0.0
    %107 = vmatprep.subr.mxu0 0.0
    %108 = vmatpush1.msra.mxu0 0.0
    %109 = vmatprep.subr.mxu0 0.0
    %110 = vmatpush1.msra.mxu0 0.0
    %111 = vmatprep.subr.mxu0 0.0
    %112 = vmatpush1.msra.mxu0 0.0
    %113 = vmatprep.subr.mxu0 0.0
    %114 = vmatpush1.msra.mxu0 0.0
    %115 = vmatprep.subr.mxu0 0.0
    %116 = vmatpush1.msra.mxu0 0.0
    %117 = vmatprep.subr.mxu0 0.0
    %118 = vmatpush1.msra.mxu0 0.0
    %119 = vmatprep.subr.mxu0 0.0
    %120 = vmatpush1.msra.mxu0 0.0
    %121 = vmatprep.subr.mxu0 0.0
    %122 = vmatpush1.msra.mxu0 0.0
    %123 = vmatprep.subr.mxu0 0.0
    %124 = vmatpush1.msra.mxu0 0.0
    %125 = vmatprep.subr.mxu0 0.0
    %126 = vmatpush1.msra.mxu0 0.0
    %127 = vmatprep.subr.mxu0 0.0
    %128 = vmatpush1.msra.mxu0 0.0
    %129 = vmatprep.subr.mxu0 0.0
    %130 = vmatpush1.msra.mxu0 0.0
    %131 = vmatprep.subr.mxu0 0.0
    %132 = vmatpush1.msra.mxu0 0.0
    %133 = vmatprep.subr.mxu0 0.0
    %134 = vmatpush1.msra.mxu0 0.0
    %135 = vmatprep.subr.mxu0 0.0
    %136 = vmatpush1.msra.mxu0 0.0
    %137 = vmatprep.subr.mxu0 0.0
    %138 = vmatpush1.msra.mxu0 0.0
    %139 = vmatprep.mubr.f32.mxu0 0.0
    %140 = vmatmul.mubr.f32.gmra.mrb[0].mxu0 %v73
    %v141 = vpop.f32.mrb[0].mxu0
    %v142 = vadd.f32 0.0, %v141
    %v143 = vpop.f32.mrb[0].mxu0
    %144 = vdwg.mxu0
    %v145 = vlaneseq
    %v146 = vshrl.u32 %v145, 7
    %v147 = vsub.s32 0, %v146
    %v148 = vrot.slane %v142, %v147
    %150 = vbcast.lane.b32.xlu0 %v148, 256
    %v151 = vpop.permute.xlu0 %150
    %s153 = sor.u32 256, 8
    %154 = vbcast.lane.b32.xlu0 %v148, %s153
    %v155 = vpop.permute.xlu0 %154
    %v156 = vlaneseq
    %v157 = vshrl.u32 %v156, 7
    %v158 = vsub.s32 1, %v157
    %v159 = vrot.slane %v142, %v158
    %161 = vbcast.lane.b32.xlu0 %v159, 256
    %v162 = vpop.permute.xlu0 %161
    %s164 = sor.u32 256, 8
    %165 = vbcast.lane.b32.xlu0 %v159, %s164
    %v166 = vpop.permute.xlu0 %165
    %v167 = vld [vmem:[%s3] sm:$0x1]
    %v169 = vlaneseq
    %v170 = vshrl.u32 %v169, 7
    %v171 = vsub.s32 0, %v170
    %v172 = vrot.slane %v167, %v171
    %v174 = vmul.f32 %v151, %v172
    %v175 = vmul.f32 %v155, %v172
    %v176 = vmul.f32 %v162, %v172
    %v177 = vmul.f32 %v166, %v172
    %v178 = vmax.f32 %v174, 0.0
    %v179 = vmax.f32 %v175, 0.0
    %v180 = vmax.f32 %v176, 0.0
    %v181 = vmax.f32 %v177, 0.0
    %v182 = vld [vmem:[%s2] sm:$0x1]
    %v183 = vlaneseq
    %v184 = vshrl.u32 %v183, 7
    %v185 = vsub.s32 0, %v184
    %v186 = vrot.slane %v182, %v185
    %188 = vbcast.lane.b32.xlu0 %v186, 256
    %v189 = vpop.permute.xlu0 %188
    %s191 = sor.u32 256, 8
    %192 = vbcast.lane.b32.xlu0 %v186, %s191
    %v193 = vpop.permute.xlu0 %192
    %v194 = vmul.f32 %v189, %v178
    %v195 = vmul.f32 %v193, %v179
    %v196 = vmul.f32 %v189, %v180
    %v197 = vmul.f32 %v193, %v181
    %v198 = vsel %vm25, %v194, 0.0
    %v199 = vsel %vm25, %v195, 0.0
    %v200 = vadd.f32 %v198, %v199
    %v201 = vrot.slane %v200, 4
    %v202 = vadd.f32 %v200, %v201
    %v203 = vrot.slane %v202, 2
    %v204 = vadd.f32 %v202, %v203
    %v205 = vrot.slane %v204, 1
    %v206 = vadd.f32 %v204, %v205
    %v207 = vsel %vm25, %v196, 0.0
    %v208 = vsel %vm25, %v197, 0.0
    %v209 = vadd.f32 %v207, %v208
    %v210 = vrot.slane %v209, 4
    %v211 = vadd.f32 %v209, %v210
    %v212 = vrot.slane %v211, 2
    %v213 = vadd.f32 %v211, %v212
    %v214 = vrot.slane %v213, 1
    %v215 = vadd.f32 %v213, %v214
    %v216 = vld [vmem:[%s4] sm:$0xff]
    %v217 = vld [vmem:[%s4 + $0x8] sm:$0xff]
    %v218 = vld [vmem:[%s4 + $0x10] sm:$0xff]
    %v219 = vld [vmem:[%s4 + $0x18] sm:$0xff]
    %v220 = vld [vmem:[%s4 + $0x20] sm:$0xff]
    %v221 = vld [vmem:[%s4 + $0x28] sm:$0xff]
    %v222 = vld [vmem:[%s4 + $0x30] sm:$0xff]
    %v223 = vld [vmem:[%s4 + $0x38] sm:$0xff]
    %v226 = vsel %vm70, %v215, %v206
    %v227 = vsel %vm25, %v226, 0
    %229 = vmatprep.subr.mxu0 0.0
    %230 = vmatpush1.msra.mxu0 %v216
    %231 = vmatprep.subr.mxu0 0.0
    %232 = vmatpush1.msra.mxu0 %v217
    %233 = vmatprep.subr.mxu0 0.0
    %234 = vmatpush1.msra.mxu0 %v218
    %235 = vmatprep.subr.mxu0 0.0
    %236 = vmatpush1.msra.mxu0 %v219
    %237 = vmatprep.subr.mxu0 0.0
    %238 = vmatpush1.msra.mxu0 %v220
    %239 = vmatprep.subr.mxu0 0.0
    %240 = vmatpush1.msra.mxu0 %v221
    %241 = vmatprep.subr.mxu0 0.0
    %242 = vmatpush1.msra.mxu0 %v222
    %243 = vmatprep.subr.mxu0 0.0
    %244 = vmatpush1.msra.mxu0 %v223
    %245 = vmatprep.subr.mxu0 0.0
    %246 = vmatpush1.msra.mxu0 0.0
    %247 = vmatprep.subr.mxu0 0.0
    %248 = vmatpush1.msra.mxu0 0.0
    %249 = vmatprep.subr.mxu0 0.0
    %250 = vmatpush1.msra.mxu0 0.0
    %251 = vmatprep.subr.mxu0 0.0
    %252 = vmatpush1.msra.mxu0 0.0
    %253 = vmatprep.subr.mxu0 0.0
    %254 = vmatpush1.msra.mxu0 0.0
    %255 = vmatprep.subr.mxu0 0.0
    %256 = vmatpush1.msra.mxu0 0.0
    %257 = vmatprep.subr.mxu0 0.0
    %258 = vmatpush1.msra.mxu0 0.0
    %259 = vmatprep.subr.mxu0 0.0
    %260 = vmatpush1.msra.mxu0 0.0
    %261 = vmatprep.subr.mxu0 0.0
    %262 = vmatpush1.msra.mxu0 0.0
    %263 = vmatprep.subr.mxu0 0.0
    %264 = vmatpush1.msra.mxu0 0.0
    %265 = vmatprep.subr.mxu0 0.0
    %266 = vmatpush1.msra.mxu0 0.0
    %267 = vmatprep.subr.mxu0 0.0
    %268 = vmatpush1.msra.mxu0 0.0
    %269 = vmatprep.subr.mxu0 0.0
    %270 = vmatpush1.msra.mxu0 0.0
    %271 = vmatprep.subr.mxu0 0.0
    %272 = vmatpush1.msra.mxu0 0.0
    %273 = vmatprep.subr.mxu0 0.0
    %274 = vmatpush1.msra.mxu0 0.0
    %275 = vmatprep.subr.mxu0 0.0
    %276 = vmatpush1.msra.mxu0 0.0
    %277 = vmatprep.subr.mxu0 0.0
    %278 = vmatpush1.msra.mxu0 0.0
    %279 = vmatprep.subr.mxu0 0.0
    %280 = vmatpush1.msra.mxu0 0.0
    %281 = vmatprep.subr.mxu0 0.0
    %282 = vmatpush1.msra.mxu0 0.0
    %283 = vmatprep.subr.mxu0 0.0
    %284 = vmatpush1.msra.mxu0 0.0
    %285 = vmatprep.subr.mxu0 0.0
    %286 = vmatpush1.msra.mxu0 0.0
    %287 = vmatprep.subr.mxu0 0.0
    %288 = vmatpush1.msra.mxu0 0.0
    %289 = vmatprep.subr.mxu0 0.0
    %290 = vmatpush1.msra.mxu0 0.0
    %291 = vmatprep.subr.mxu0 0.0
    %292 = vmatpush1.msra.mxu0 0.0
    %293 = vmatprep.mubr.f32.mxu0 0.0
    %294 = vmatmul.mubr.f32.gmra.mrb[0].mxu0 %v227
    %v295 = vpop.f32.mrb[0].mxu0
    %v296 = vadd.f32 0.0, %v295
    %v297 = vpop.f32.mrb[0].mxu0
    %298 = vdwg.mxu0
    %299 = vst [vmem:[#allocation2] sm:$0x3] %v296
    // Predicated region
    $region22: #{forward.1} parent=1 // pred_check
      _
    $region23: #{forward.1} parent=1 // pred_check_branch
      %301 = sbr.rel (0) target = $region25
    $region24: #{forward.1} parent=1 // pred_region
      %s303 = ssub.s32 32, 32
      %304 = vsyncadd [#allocation3], %s303
      %s306 = sshll.u32 [#allocation2], 4
      %s307 = int_to_ptr.vmem [resolvable:$true] %s306
      %309 = dma.vmem_to_hbm [thread:$0]  %s307, 32, %s5, [#allocation3]
    $region25: #{forward.1} parent=1 // pred_fallthru
      _
    // Predicated region
    $region26: #{forward.1} parent=1 // pred_check
      _
    $region27: #{forward.1} parent=1 // pred_check_branch
      %311 = sbr.rel (0) target = $region29
    $region28: #{forward.1} parent=1 // pred_region
      %312 = dma.done [#allocation3], 32
    $region29: #{forward.1} parent=1 // pred_fallthru
      _
    %313 = vsyncpa [#allocation3], 1

</llo_original>
